<compile_context>
chip_gen: v5e
topology: v5e:2x2
jax: 0.10.0
libtpu: 0.0.40
codegen_flags: <defaults>
</compile_context>

<pallas_src>
import functools

import jax
import jax.numpy as jnp
from jax import lax
from jax.experimental import pallas as pl
from jax.experimental.pallas import tpu as pltpu

BN_EPS = 1e-5
_VMEM_LIMIT = 64 * 1024 * 1024


def _round_up(x, m):
    return (x + m - 1) // m * m


def _row_tile(m, cap):
    # largest row tile (multiple of 8, <= cap); callers zero-pad rows up to a multiple
    return min(cap, _round_up(m, 8))


# ------------------------- Pallas kernels -------------------------

def _pw_bn_relu_kernel(x_ref, w_ref, scale_ref, shift_ref, o_ref):
    # 1x1 conv (matmul) + folded BN + ReLU
    y = jnp.dot(x_ref[...], w_ref[...], preferred_element_type=jnp.float32)
    y = y * scale_ref[...] + shift_ref[...]
    o_ref[...] = jnp.maximum(y, 0.0).astype(o_ref.dtype)


def _att_agg_kernel(y1_ref, attw_ref, wflat_ref, wagg_ref, sum_sc, *, inv_hw):
    # fused: global average pool (tiled reduction) + attention 1x1 + sigmoid
    #        + expert-weight aggregation (att @ flattened expert bank)
    t = pl.program_id(1)

    @pl.when(t == 0)
    def _():
        sum_sc[...] = jnp.zeros_like(sum_sc)

    sum_sc[...] += jnp.sum(y1_ref[0].astype(jnp.float32), axis=0, keepdims=True)

    @pl.when(t == pl.num_programs(1) - 1)
    def _():
        pooled = sum_sc[...] * inv_hw                                            # (1, C)
        att = jax.nn.sigmoid(
            jnp.dot(pooled, attw_ref[...], preferred_element_type=jnp.float32))  # (1, K)
        wagg = jnp.dot(att, wflat_ref[...], preferred_element_type=jnp.float32)  # (1, 9*ci*co)
        wagg_ref[0] = wagg.astype(wagg_ref.dtype)


def _condconv_kernel(x_ref, w_ref, scale_ref, shift_ref, o_ref, xcol_sc,
                     *, stride, Ho, Wo, cin):
    # per-sample 3x3 conv: assemble the 9 taps in VMEM and contract with one deep
    # matmul (K = 9*cin), then folded BN + ReLU
    for dy in range(3):
        for dx in range(3):
            if stride == 1:
                tap = x_ref[0, dy:dy + Ho, dx:dx + Wo, :]            # (Ho, Wo, cin)
            else:
                lat = (dy % 2) * 2 + (dx % 2)
                r0, c0 = dy // 2, dx // 2
                tap = x_ref[0, lat, r0:r0 + Ho, c0:c0 + Wo, :]       # (Ho, Wo, cin)
            t = dy * 3 + dx
            xcol_sc[:, :, t * cin:(t + 1) * cin] = tap
    xcol = xcol_sc[...].reshape(Ho * Wo, 9 * cin)                    # (Ho*Wo, 9*cin)
    y = jnp.dot(xcol, w_ref[0], preferred_element_type=jnp.float32)  # (Ho*Wo, cout)
    y = y * scale_ref[...] + shift_ref[...]
    o_ref[0] = jnp.maximum(y, 0.0).astype(o_ref.dtype)


def _final_fused_kernel(y3_ref, xr_ref, w2_ref, s2_ref, b2_ref,
                        wres_ref, sr_ref, br_ref, o_ref, *, cin):
    # conv1_2 + BN  +  residual 1x1 (strided read done in-kernel) + BN  + add + ReLU
    y = jnp.dot(y3_ref[0], w2_ref[...], preferred_element_type=jnp.float32)
    y = y * s2_ref[...] + b2_ref[...]
    xr = xr_ref[0, :, 0, :, :cin]                                    # (Ho, Wo, Cin)
    xr = xr.reshape(-1, cin)                                         # (Ho*Wo, Cin)
    r = jnp.dot(xr, wres_ref[...], preferred_element_type=jnp.float32)
    r = r * sr_ref[...] + br_ref[...]
    o_ref[0] = jnp.maximum(y + r, 0.0).astype(o_ref.dtype)


# ------------------------- pallas_call wrappers -------------------------

def pointwise_bn_relu(x2d, w, scale, shift, *, out_dtype):
    M, cin = x2d.shape
    cout = w.shape[1]
    tm = _row_tile(M, cap=1024)          # big tiles: this op is HBM-bound
    Mp = _round_up(M, tm)
    if Mp != M:
        x2d = jnp.pad(x2d, ((0, Mp - M), (0, 0)))
    out = pl.pallas_call(
        _pw_bn_relu_kernel,
        out_shape=jax.ShapeDtypeStruct((Mp, cout), out_dtype),
        grid_spec=pltpu.PrefetchScalarGridSpec(
            num_scalar_prefetch=0,
            grid=(Mp // tm,),
            in_specs=[
                pl.BlockSpec((tm, cin), lambda i: (i, 0)),
                pl.BlockSpec((cin, cout), lambda i: (0, 0)),
                pl.BlockSpec((1, cout), lambda i: (0, 0)),
                pl.BlockSpec((1, cout), lambda i: (0, 0)),
            ],
            out_specs=pl.BlockSpec((tm, cout), lambda i: (i, 0)),
        ),
        compiler_params=pltpu.CompilerParams(
            dimension_semantics=("parallel",),
            vmem_limit_bytes=_VMEM_LIMIT),
    )(x2d, w, scale, shift)
    return out[:M] if Mp != M else out


def attention_aggregate(y1_3d, att_w, wflat, *, out_dtype):
    # y1_3d: (N, H*W, C)  att_w: (C, K)  wflat: (K, 9*Cin*Cout) -> (N, 9*Cin*Cout)
    N, hw, cmid = y1_3d.shape
    K = att_w.shape[1]
    flat = wflat.shape[1]
    tsp = _row_tile(hw, cap=2048)
    hwp = _round_up(hw, tsp)
    if hwp != hw:
        # zero rows do not change the pooled sum (we divide by the true H*W)
        y1_3d = jnp.pad(y1_3d, ((0, 0), (0, hwp - hw), (0, 0)))
    out = pl.pallas_call(
        functools.partial(_att_agg_kernel, inv_hw=1.0 / hw),
        out_shape=jax.ShapeDtypeStruct((N, 1, flat), out_dtype),
        grid_spec=pltpu.PrefetchScalarGridSpec(
            num_scalar_prefetch=0,
            grid=(N, hwp // tsp),
            in_specs=[
                pl.BlockSpec((1, tsp, cmid), lambda n, t: (n, t, 0)),
                pl.BlockSpec((cmid, K), lambda n, t: (0, 0)),
                pl.BlockSpec((K, flat), lambda n, t: (0, 0)),
            ],
            out_specs=pl.BlockSpec((1, 1, flat), lambda n, t: (n, 0, 0)),
            scratch_shapes=[pltpu.VMEM((1, cmid), jnp.float32)],
        ),
        compiler_params=pltpu.CompilerParams(
            dimension_semantics=("parallel", "arbitrary"),
            vmem_limit_bytes=_VMEM_LIMIT),
    )(y1_3d, att_w, wflat)
    return out.reshape(N, flat)


def condconv3x3_bn_relu(xprep, wagg, scale, shift, *, stride, Ho, Wo, out_dtype):
    # xprep: stride==1 -> (N, H+2, W+2, cin) padded slab
    #        stride==2 -> (N, 4, H/2+1, W/2+1, cin) even/odd lattices
    # wagg : (N, 9*cin, cout)
    N = xprep.shape[0]
    cin = xprep.shape[-1]
    kflat, cout = wagg.shape[1], wagg.shape[2]
    assert kflat == 9 * cin
    if stride == 1:
        _, Hp, Wp, _ = xprep.shape
        x_spec = pl.BlockSpec((1, Hp, Wp, cin), lambda n: (n, 0, 0, 0))
    else:
        _, L, Hh, Wh, _ = xprep.shape
        x_spec = pl.BlockSpec((1, L, Hh, Wh, cin), lambda n: (n, 0, 0, 0, 0))
    # TODO(synk): for very large H*W also tile Ho*Wo (halo blocks) to bound VMEM on v7x.
    return pl.pallas_call(
        functools.partial(_condconv_kernel, stride=stride, Ho=Ho, Wo=Wo, cin=cin),
        out_shape=jax.ShapeDtypeStruct((N, Ho * Wo, cout), out_dtype),
        grid_spec=pltpu.PrefetchScalarGridSpec(
            num_scalar_prefetch=0,
            grid=(N,),
            in_specs=[
                x_spec,
                pl.BlockSpec((1, kflat, cout), lambda n: (n, 0, 0)),
                pl.BlockSpec((1, cout), lambda n: (0, 0)),
                pl.BlockSpec((1, cout), lambda n: (0, 0)),
            ],
            out_specs=pl.BlockSpec((1, Ho * Wo, cout), lambda n: (n, 0, 0)),
            scratch_shapes=[pltpu.VMEM((Ho, Wo, kflat), xprep.dtype)],
        ),
        compiler_params=pltpu.CompilerParams(
            dimension_semantics=("parallel",),
            vmem_limit_bytes=_VMEM_LIMIT),
    )(xprep, wagg, scale, shift)


def conv1x1_residual_fused(y3, x_rr, w2, s2, b2, wres, sr, br, *, cin, out_dtype):
    # y3: (N, Ho*Wo, mid)   x_rr: (N, Ho, stride, Wo, stride*Cin) (free regroup of x)
    N, howo, cmid = y3.shape
    cout = w2.shape[1]
    _, Ho, _s, Wo, sc = x_rr.shape
    return pl.pallas_call(
        functools.partial(_final_fused_kernel, cin=cin),
        out_shape=jax.ShapeDtypeStruct((N, howo, cout), out_dtype),
        grid_spec=pltpu.PrefetchScalarGridSpec(
            num_scalar_prefetch=0,
            grid=(N,),
            in_specs=[
                pl.BlockSpec((1, howo, cmid), lambda n: (n, 0, 0)),
                pl.BlockSpec((1, Ho, 1, Wo, sc), lambda n: (n, 0, 0, 0, 0)),
                pl.BlockSpec((cmid, cout), lambda n: (0, 0)),
                pl.BlockSpec((1, cout), lambda n: (0, 0)),
                pl.BlockSpec((1, cout), lambda n: (0, 0)),
                pl.BlockSpec((cin, cout), lambda n: (0, 0)),
                pl.BlockSpec((1, cout), lambda n: (0, 0)),
                pl.BlockSpec((1, cout), lambda n: (0, 0)),
            ],
            out_specs=pl.BlockSpec((1, howo, cout), lambda n: (n, 0, 0)),
        ),
        compiler_params=pltpu.CompilerParams(
            dimension_semantics=("parallel",),
            vmem_limit_bytes=_VMEM_LIMIT),
    )(y3, x_rr, w2, s2, b2, wres, sr, br)


# ------------------------- glue (plain JAX) -------------------------

def _bn_scale_shift(gamma, beta, mean, var):
    scale = gamma / jnp.sqrt(var + BN_EPS)
    shift = beta - mean * scale
    return scale[None, :], shift[None, :]


def init_params(key, in_ch, out_ch, K=4):
    mid = out_ch // 4
    ks = jax.random.split(key, 5)

    def he(k, shape, fan_in):
        return jax.random.normal(k, shape, jnp.float32) * jnp.sqrt(2.0 / fan_in)

    p = {}
    p["w1"] = he(ks[0], (in_ch, mid), in_ch)            # conv1_1 1x1 (Cin, Cout)
    p["att_w"] = he(ks[1], (mid, K), mid)               # attention 1x1 (Cin, K)
    # CondConv expert weights, PyTorch layout (K, out, in, 3, 3)
    wc = he(ks[2], (K, mid, mid, 3, 3), mid * 9)
    p["wcond"] = wc
    # pre-permuted flat copy (K, 9*in*out) in (dy, dx, cin, cout) order for the kernel
    p["wcond_taps"] = jnp.transpose(wc, (0, 3, 4, 2, 1)).reshape(K, 9 * mid * mid)
    p["w2"] = he(ks[3], (mid, out_ch), mid)             # conv1_2 1x1
    p["wres"] = he(ks[4], (in_ch, out_ch), in_ch)       # conv_res 1x1
    # BatchNorm (inference): gamma, beta, running_mean, running_var
    for name, c in (("bn1", mid), ("bn3", mid), ("bn2", out_ch), ("bnr", out_ch)):
        p[name] = (jnp.ones((c,), jnp.float32), jnp.zeros((c,), jnp.float32),
                   jnp.zeros((c,), jnp.float32), jnp.ones((c,), jnp.float32))
    return p


def bottleneck_forward(x_nchw, params, *, downsample=True, act_dtype=jnp.float32):
    N, Cin, H, W = x_nchw.shape
    stride = 2 if downsample else 1
    assert H % stride == 0 and W % stride == 0
    mid = params["w1"].shape[1]
    out_ch = params["w2"].shape[1]
    Ho, Wo = H // stride, W // stride

    # TODO(synk): expose an NHWC entry point to drop these boundary transposes.
    x = jnp.transpose(x_nchw, (0, 2, 3, 1)).astype(jnp.float32)          # NHWC

    # conv1_1 (1x1) + BN + ReLU
    s1, b1 = _bn_scale_shift(*params["bn1"])
    y1 = pointwise_bn_relu(x.reshape(N * H * W, Cin), params["w1"], s1, b1,
                           out_dtype=act_dtype)                          # (N*H*W, mid)

    # attention (pool + 1x1 + sigmoid) fused with expert-weight aggregation
    wagg = attention_aggregate(y1.reshape(N, H * W, mid), params["att_w"],
                               params["wcond_taps"], out_dtype=act_dtype)
    wagg = wagg.reshape(N, 9 * mid, mid)                                 # (N, 9*cin, cout)

    # CondConv 3x3, stride, pad=1: single deep contraction per sample (no HBM im2col)
    y1_nhwc = y1.reshape(N, H, W, mid)
    xpad = jnp.pad(y1_nhwc, ((0, 0), (1, 1), (1, 1), (0, 0)))
    if stride == 1:
        xprep = xpad                                                     # (N, H+2, W+2, mid)
    else:
        # space-to-depth: even/odd lattices so every tap is an unstrided in-kernel slice
        xprep = jnp.stack([xpad[:, p::2, q::2, :] for p in range(2) for q in range(2)],
                          axis=1)                                        # (N, 4, H/2+1, W/2+1, mid)
    s3, b3 = _bn_scale_shift(*params["bn3"])
    y3 = condconv3x3_bn_relu(xprep, wagg, s3, b3, stride=stride, Ho=Ho, Wo=Wo,
                             out_dtype=act_dtype)                        # (N, Ho*Wo, mid)

    # conv1_2 + BN + residual 1x1 (strided, read in-kernel) + BN + add + ReLU, fused
    x_rr = x.reshape(N, Ho, stride, Wo, stride * Cin)                    # free regrouping
    s2, b2 = _bn_scale_shift(*params["bn2"])
    sr, br = _bn_scale_shift(*params["bnr"])
    out = conv1x1_residual_fused(y3, x_rr, params["w2"].astype(act_dtype), s2, b2,
                                 params["wres"], sr, br,
                                 cin=Cin, out_dtype=jnp.float32)         # (N, Ho*Wo, out_ch)
    out = out.reshape(N, Ho, Wo, out_ch)
    return jnp.transpose(out, (0, 3, 1, 2))                              # NCHW


# ------------------------- pure-JAX reference (for sanity check) -------------------------

def bottleneck_reference(x_nchw, params, *, downsample=True):
    stride = 2 if downsample else 1
    N = x_nchw.shape[0]
    prec = lax.Precision.HIGHEST
    x = jnp.transpose(x_nchw, (0, 2, 3, 1)).astype(jnp.float32)

    def bn(y, p):
        g, b, m, v = p
        return (y - m) / jnp.sqrt(v + BN_EPS) * g + b

    y1 = jnp.einsum("nhwc,cd->nhwd", x, params["w1"], precision=prec)
    y1 = jax.nn.relu(bn(y1, params["bn1"]))

    att = jax.nn.sigmoid(jnp.einsum("nc,ck->nk", y1.mean(axis=(1, 2)),
                                    params["att_w"], precision=prec))
    wagg = jnp.einsum("nk,koiyx->noiyx", att, params["wcond"], precision=prec)

    outs = []
    for n in range(N):
        xn = y1[n:n + 1]
        wn = jnp.transpose(wagg[n], (2, 3, 1, 0))  # HWIO
        yn = lax.conv_general_dilated(
            xn, wn, window_strides=(stride, stride), padding=((1, 1), (1, 1)),
            dimension_numbers=("NHWC", "HWIO", "NHWC"), precision=prec)
        outs.append(yn)
    y3 = jax.nn.relu(bn(jnp.concatenate(outs, axis=0), params["bn3"]))

    y2 = bn(jnp.einsum("nhwc,cd->nhwd", y3, params["w2"], precision=prec), params["bn2"])
    res = bn(jnp.einsum("nhwc,cd->nhwd", x[:, ::stride, ::stride, :],
                        params["wres"], precision=prec), params["bnr"])
    out = jax.nn.relu(y2 + res)
    return jnp.transpose(out, (0, 3, 1, 2))


# ------------------------- main -------------------------

if __name__ == "__main__":
    key = jax.random.PRNGKey(0)
    kx, kp = jax.random.split(key)

    N, in_ch, out_ch, H, W = 2, 8, 16, 16, 16
    x = jax.random.normal(kx, (N, in_ch, H, W), jnp.float32)
    params = init_params(kp, in_ch, out_ch, K=4)

    ref = jax.block_until_ready(bottleneck_reference(x, params, downsample=True))

    # f32 activations: elementwise check
    out = jax.block_until_ready(
        bottleneck_forward(x, params, downsample=True, act_dtype=jnp.float32))
    assert out.shape == (N, out_ch, H // 2, W // 2), out.shape
    assert jnp.allclose(out, ref, rtol=1e-2, atol=1e-2), float(jnp.max(jnp.abs(out - ref)))

    # bf16 inter-kernel activations (HBM-bound fast path): aggregate relative error
    out_bf = jax.block_until_ready(
        bottleneck_forward(x, params, downsample=True, act_dtype=jnp.bfloat16))
    rel = float(jnp.linalg.norm(out_bf - ref) / (jnp.linalg.norm(ref) + 1e-12))
    assert rel < 3e-2, rel

    print("KERNEL_OK")
</pallas_src>

<mosaic_0001>
module attributes {stable_mosaic.version = 11 : i64} {
  func.func @_pw_bn_relu_kernel(%arg0: i32, %arg1: memref<512x8xf32, #tpu.memory_space<vmem>>, %arg2: memref<8x4xf32, #tpu.memory_space<vmem>>, %arg3: memref<1x4xf32, #tpu.memory_space<vmem>>, %arg4: memref<1x4xf32, #tpu.memory_space<vmem>>, %arg5: memref<512x4xf32, #tpu.memory_space<vmem>>) attributes {dimension_semantics = [#tpu.dimension_semantics<parallel>], iteration_bounds = array<i64: 1>, scalar_prefetch = 0 : i64, scratch_operands = 0 : i64, tpu.core_type = #tpu.core_type<tc>, window_params = [{transform_indices = @transform_0, window_bounds = array<i64: 512, 8>}, {pipeline_mode = #tpu.pipeline_mode<synchronous>, transform_indices = @transform_1, window_bounds = array<i64: 8, 4>}, {pipeline_mode = #tpu.pipeline_mode<synchronous>, transform_indices = @transform_2, window_bounds = array<i64: 1, 4>}, {pipeline_mode = #tpu.pipeline_mode<synchronous>, transform_indices = @transform_3, window_bounds = array<i64: 1, 4>}, {transform_indices = @transform_4, window_bounds = array<i64: 512, 4>}]} {
    %c0 = arith.constant 0 : index
    %c0_0 = arith.constant 0 : index
    %0 = vector.load %arg1[%c0, %c0_0] : memref<512x8xf32, #tpu.memory_space<vmem>>, vector<512x8xf32>
    %c0_1 = arith.constant 0 : index
    %c0_2 = arith.constant 0 : index
    %1 = vector.load %arg2[%c0_1, %c0_2] : memref<8x4xf32, #tpu.memory_space<vmem>>, vector<8x4xf32>
    %cst = arith.constant dense<0.000000e+00> : vector<512x4xf32>
    %2 = tpu.matmul %0, %1, %cst {dimension_numbers = #tpu.dot_dimension_numbers<[1], [0], [0], [1], [0, 0, 1, 1], [], []>} : vector<512x8xf32>, vector<8x4xf32>, vector<512x4xf32> -> vector<512x4xf32>
    %c0_3 = arith.constant 0 : index
    %c0_4 = arith.constant 0 : index
    %3 = vector.load %arg3[%c0_3, %c0_4] : memref<1x4xf32, #tpu.memory_space<vmem>>, vector<1x4xf32>
    %4 = vector.broadcast %3 : vector<1x4xf32> to vector<512x4xf32>
    %5 = arith.mulf %2, %4 : vector<512x4xf32>
    %c0_5 = arith.constant 0 : index
    %c0_6 = arith.constant 0 : index
    %6 = vector.load %arg4[%c0_5, %c0_6] : memref<1x4xf32, #tpu.memory_space<vmem>>, vector<1x4xf32>
    %7 = vector.broadcast %6 : vector<1x4xf32> to vector<512x4xf32>
    %8 = arith.addf %5, %7 : vector<512x4xf32>
    %cst_7 = arith.constant 0.000000e+00 : f32
    %9 = vector.broadcast %cst_7 : f32 to vector<512x4xf32>
    %10 = arith.maximumf %8, %9 : vector<512x4xf32>
    %c0_8 = arith.constant 0 : index
    %c0_9 = arith.constant 0 : index
    %11 = vector.load %arg5[%c0_8, %c0_9] : memref<512x4xf32, #tpu.memory_space<vmem>>, vector<512x4xf32>
    tpu.vector_store %arg5[%c0_8, %c0_9], %10 {strides = array<i32>} : memref<512x4xf32, #tpu.memory_space<vmem>>, vector<512x4xf32>,
    return
  }
  func.func @transform_0(%arg0: i32) -> (i32, i32) {
    %c0_i32 = arith.constant 0 : i32
    %c0_i32_0 = arith.constant 0 : i32
    return %arg0, %c0_i32 : i32, i32
  }
  func.func @transform_1(%arg0: i32) -> (i32, i32) {
    %c0_i32 = arith.constant 0 : i32
    %c0_i32_0 = arith.constant 0 : i32
    %c0_i32_1 = arith.constant 0 : i32
    return %c0_i32, %c0_i32_0 : i32, i32
  }
  func.func @transform_2(%arg0: i32) -> (i32, i32) {
    %c0_i32 = arith.constant 0 : i32
    %c0_i32_0 = arith.constant 0 : i32
    %c0_i32_1 = arith.constant 0 : i32
    return %c0_i32, %c0_i32_0 : i32, i32
  }
  func.func @transform_3(%arg0: i32) -> (i32, i32) {
    %c0_i32 = arith.constant 0 : i32
    %c0_i32_0 = arith.constant 0 : i32
    %c0_i32_1 = arith.constant 0 : i32
    return %c0_i32, %c0_i32_0 : i32, i32
  }
  func.func @transform_4(%arg0: i32) -> (i32, i32) {
    %c0_i32 = arith.constant 0 : i32
    %c0_i32_0 = arith.constant 0 : i32
    return %arg0, %c0_i32 : i32, i32
  }
}

</mosaic_0001>

<llo_original>
// kernel: tpu_custom_call.1
$region0: #{tpu_custom_call.1}
  #allocation0 [shape = 'u32[]', space=smem, size = 0x4, offset = 0x4, fixed_abs, tag = 'smem constant byte address 0x4 - core index']
  #allocation1 [shape = 'u32[72,128]{1,0:T(1,128)}', space=vmem, size = 0x9000, scoped, tag = 'internal scratch']
  %s0 = inlined_call_operand.vmem [shape: f32[512,8], index: 0, kind: input, shape index: {}]
  %s1 = inlined_call_operand.vmem [shape: f32[8,4], index: 1, kind: input, shape index: {}]
  %s2 = inlined_call_operand.vmem [shape: f32[1,4], index: 2, kind: input, shape index: {}]
  %s3 = inlined_call_operand.vmem [shape: f32[1,4], index: 3, kind: input, shape index: {}]
  %s4 = inlined_call_operand.vmem [shape: f32[512,4], index: 4, kind: output, shape index: {}]
  %s5 = sld [smem:[#allocation0]]
  $region26: #{tpu_custom_call.1} parent=0
    _
  %s7 = ssub.s32 1, %s5
  %s8 = scalar_select 0, %s7, %s5
  // Predicated region
  $region2: #{tpu_custom_call.1} parent=0 // pred_check
    _
  $region3: #{tpu_custom_call.1} parent=0 // pred_check_branch
    %10 = sbr.rel (0) target = $region5
  $region4: #{tpu_custom_call.1} parent=0 // pred_region
    _
  $region5: #{tpu_custom_call.1} parent=0 // pred_fallthru
    _
  // Predicated region
  $region6: #{tpu_custom_call.1} parent=0 // pred_check
    _
  $region7: #{tpu_custom_call.1} parent=0 // pred_check_branch
    %12 = sbr.rel (0) target = $region9
  $region8: #{tpu_custom_call.1} parent=0 // pred_region
    _
  $region9: #{tpu_custom_call.1} parent=0 // pred_fallthru
    _
  // Predicated region
  $region10: #{tpu_custom_call.1} parent=0 // pred_check
    _
  $region11: #{tpu_custom_call.1} parent=0 // pred_check_branch
    %14 = sbr.rel (0) target = $region13
  $region12: #{tpu_custom_call.1} parent=0 // pred_region
    _
  $region13: #{tpu_custom_call.1} parent=0 // pred_fallthru
    _
  // Predicated region
  $region14: #{tpu_custom_call.1} parent=0 // pred_check
    _
  $region15: #{tpu_custom_call.1} parent=0 // pred_check_branch
    %16 = sbr.rel (0) target = $region17
  $region16: #{tpu_custom_call.1} parent=0 // pred_region
    _
  $region17: #{tpu_custom_call.1} parent=0 // pred_fallthru
    _
  %v17 = vld [vmem:[%s0] sm:$0xff]
  %v18 = vld [vmem:[%s0 + $0x8] sm:$0xff]
  %v19 = vld [vmem:[%s0 + $0x10] sm:$0xff]
  %v20 = vld [vmem:[%s0 + $0x18] sm:$0xff]
  %v21 = vld [vmem:[%s0 + $0x20] sm:$0xff]
  %v22 = vld [vmem:[%s0 + $0x28] sm:$0xff]
  %v23 = vld [vmem:[%s0 + $0x30] sm:$0xff]
  %v24 = vld [vmem:[%s0 + $0x38] sm:$0xff]
  %v25 = vld [vmem:[%s0 + $0x40] sm:$0xff]
  %v26 = vld [vmem:[%s0 + $0x48] sm:$0xff]
  %v27 = vld [vmem:[%s0 + $0x50] sm:$0xff]
  %v28 = vld [vmem:[%s0 + $0x58] sm:$0xff]
  %v29 = vld [vmem:[%s0 + $0x60] sm:$0xff]
  %v30 = vld [vmem:[%s0 + $0x68] sm:$0xff]
  %v31 = vld [vmem:[%s0 + $0x70] sm:$0xff]
  %v32 = vld [vmem:[%s0 + $0x78] sm:$0xff]
  %v33 = vld [vmem:[%s0 + $0x80] sm:$0xff]
  %v34 = vld [vmem:[%s0 + $0x88] sm:$0xff]
  %v35 = vld [vmem:[%s0 + $0x90] sm:$0xff]
  %v36 = vld [vmem:[%s0 + $0x98] sm:$0xff]
  %v37 = vld [vmem:[%s0 + $0xa0] sm:$0xff]
  %v38 = vld [vmem:[%s0 + $0xa8] sm:$0xff]
  %v39 = vld [vmem:[%s0 + $0xb0] sm:$0xff]
  %v40 = vld [vmem:[%s0 + $0xb8] sm:$0xff]
  %v41 = vld [vmem:[%s0 + $0xc0] sm:$0xff]
  %v42 = vld [vmem:[%s0 + $0xc8] sm:$0xff]
  %v43 = vld [vmem:[%s0 + $0xd0] sm:$0xff]
  %v44 = vld [vmem:[%s0 + $0xd8] sm:$0xff]
  %v45 = vld [vmem:[%s0 + $0xe0] sm:$0xff]
  %v46 = vld [vmem:[%s0 + $0xe8] sm:$0xff]
  %v47 = vld [vmem:[%s0 + $0xf0] sm:$0xff]
  %v48 = vld [vmem:[%s0 + $0xf8] sm:$0xff]
  %v49 = vld [vmem:[%s0 + $0x100] sm:$0xff]
  %v50 = vld [vmem:[%s0 + $0x108] sm:$0xff]
  %v51 = vld [vmem:[%s0 + $0x110] sm:$0xff]
  %v52 = vld [vmem:[%s0 + $0x118] sm:$0xff]
  %v53 = vld [vmem:[%s0 + $0x120] sm:$0xff]
  %v54 = vld [vmem:[%s0 + $0x128] sm:$0xff]
  %v55 = vld [vmem:[%s0 + $0x130] sm:$0xff]
  %v56 = vld [vmem:[%s0 + $0x138] sm:$0xff]
  %v57 = vld [vmem:[%s0 + $0x140] sm:$0xff]
  %v58 = vld [vmem:[%s0 + $0x148] sm:$0xff]
  %v59 = vld [vmem:[%s0 + $0x150] sm:$0xff]
  %v60 = vld [vmem:[%s0 + $0x158] sm:$0xff]
  %v61 = vld [vmem:[%s0 + $0x160] sm:$0xff]
  %v62 = vld [vmem:[%s0 + $0x168] sm:$0xff]
  %v63 = vld [vmem:[%s0 + $0x170] sm:$0xff]
  %v64 = vld [vmem:[%s0 + $0x178] sm:$0xff]
  %v65 = vld [vmem:[%s0 + $0x180] sm:$0xff]
  %v66 = vld [vmem:[%s0 + $0x188] sm:$0xff]
  %v67 = vld [vmem:[%s0 + $0x190] sm:$0xff]
  %v68 = vld [vmem:[%s0 + $0x198] sm:$0xff]
  %v69 = vld [vmem:[%s0 + $0x1a0] sm:$0xff]
  %v70 = vld [vmem:[%s0 + $0x1a8] sm:$0xff]
  %v71 = vld [vmem:[%s0 + $0x1b0] sm:$0xff]
  %v72 = vld [vmem:[%s0 + $0x1b8] sm:$0xff]
  %v73 = vld [vmem:[%s0 + $0x1c0] sm:$0xff]
  %v74 = vld [vmem:[%s0 + $0x1c8] sm:$0xff]
  %v75 = vld [vmem:[%s0 + $0x1d0] sm:$0xff]
  %v76 = vld [vmem:[%s0 + $0x1d8] sm:$0xff]
  %v77 = vld [vmem:[%s0 + $0x1e0] sm:$0xff]
  %v78 = vld [vmem:[%s0 + $0x1e8] sm:$0xff]
  %v79 = vld [vmem:[%s0 + $0x1f0] sm:$0xff]
  %v80 = vld [vmem:[%s0 + $0x1f8] sm:$0xff]
  %v81 = vld [vmem:[%s1] sm:$0xff]
  %vm82 = vcmask 64512
  %v84 = vsel %vm82, %v17, 0
  %v87 = vsel %vm82, %v18, 0
  %v90 = vsel %vm82, %v19, 0
  %v93 = vsel %vm82, %v20, 0
  %v96 = vsel %vm82, %v21, 0
  %v99 = vsel %vm82, %v22, 0
  %v102 = vsel %vm82, %v23, 0
  %v105 = vsel %vm82, %v24, 0
  %v108 = vsel %vm82, %v25, 0
  %v111 = vsel %vm82, %v26, 0
  %v114 = vsel %vm82, %v27, 0
  %v117 = vsel %vm82, %v28, 0
  %v120 = vsel %vm82, %v29, 0
  %v123 = vsel %vm82, %v30, 0
  %v126 = vsel %vm82, %v31, 0
  %v129 = vsel %vm82, %v32, 0
  %v132 = vsel %vm82, %v33, 0
  %v135 = vsel %vm82, %v34, 0
  %v138 = vsel %vm82, %v35, 0
  %v141 = vsel %vm82, %v36, 0
  %v144 = vsel %vm82, %v37, 0
  %v147 = vsel %vm82, %v38, 0
  %v150 = vsel %vm82, %v39, 0
  %v153 = vsel %vm82, %v40, 0
  %v156 = vsel %vm82, %v41, 0
  %v159 = vsel %vm82, %v42, 0
  %v162 = vsel %vm82, %v43, 0
  %v165 = vsel %vm82, %v44, 0
  %v168 = vsel %vm82, %v45, 0
  %v171 = vsel %vm82, %v46, 0
  %v174 = vsel %vm82, %v47, 0
  %v177 = vsel %vm82, %v48, 0
  %v180 = vsel %vm82, %v49, 0
  %v183 = vsel %vm82, %v50, 0
  %v186 = vsel %vm82, %v51, 0
  %v189 = vsel %vm82, %v52, 0
  %v192 = vsel %vm82, %v53, 0
  %v195 = vsel %vm82, %v54, 0
  %v198 = vsel %vm82, %v55, 0
  %v201 = vsel %vm82, %v56, 0
  %v204 = vsel %vm82, %v57, 0
  %v207 = vsel %vm82, %v58, 0
  %v210 = vsel %vm82, %v59, 0
  %v213 = vsel %vm82, %v60, 0
  %v216 = vsel %vm82, %v61, 0
  %v219 = vsel %vm82, %v62, 0
  %v222 = vsel %vm82, %v63, 0
  %v225 = vsel %vm82, %v64, 0
  %v228 = vsel %vm82, %v65, 0
  %v231 = vsel %vm82, %v66, 0
  %v234 = vsel %vm82, %v67, 0
  %v237 = vsel %vm82, %v68, 0
  %v240 = vsel %vm82, %v69, 0
  %v243 = vsel %vm82, %v70, 0
  %v246 = vsel %vm82, %v71, 0
  %v249 = vsel %vm82, %v72, 0
  %v252 = vsel %vm82, %v73, 0
  %v255 = vsel %vm82, %v74, 0
  %v258 = vsel %vm82, %v75, 0
  %v261 = vsel %vm82, %v76, 0
  %v264 = vsel %vm82, %v77, 0
  %v267 = vsel %vm82, %v78, 0
  %v270 = vsel %vm82, %v79, 0
  %v273 = vsel %vm82, %v80, 0
  %275 = vmatpush.msra.mxu0 0.0
  %276 = vmatpush.msra.mxu0 0.0
  %277 = vmatpush.msra.mxu0 0.0
  %278 = vmatpush.msra.mxu0 0.0
  %279 = vmatpush.msra.mxu0 0.0
  %280 = vmatpush.msra.mxu0 0.0
  %281 = vmatpush.msra.mxu0 0.0
  %282 = vmatpush.msra.mxu0 0.0
  %283 = vmatpush.msra.mxu0 0.0
  %284 = vmatpush.msra.mxu0 0.0
  %285 = vmatpush.msra.mxu0 0.0
  %286 = vmatpush.msra.mxu0 0.0
  %287 = vmatpush.msra.mxu0 0.0
  %288 = vmatpush.msra.mxu0 0.0
  %289 = vmatpush.msra.mxu0 0.0
  %290 = vmatpush.msra.mxu0 %v81
  %291 = vmatmul.f32.gmra.mxu0 %v84
  %v292 = vpop.f32.mrf.mxu0
  %v293 = vadd.f32 0.0, %v292
  %294 = vmatmul.f32.gmra.mxu0 %v87
  %v295 = vpop.f32.mrf.mxu0
  %v296 = vadd.f32 0.0, %v295
  %297 = vmatmul.f32.gmra.mxu0 %v90
  %v298 = vpop.f32.mrf.mxu0
  %v299 = vadd.f32 0.0, %v298
  %300 = vmatmul.f32.gmra.mxu0 %v93
  %v301 = vpop.f32.mrf.mxu0
  %v302 = vadd.f32 0.0, %v301
  %303 = vmatmul.f32.gmra.mxu0 %v96
  %v304 = vpop.f32.mrf.mxu0
  %v305 = vadd.f32 0.0, %v304
  %306 = vmatmul.f32.gmra.mxu0 %v99
  %v307 = vpop.f32.mrf.mxu0
  %v308 = vadd.f32 0.0, %v307
  %309 = vmatmul.f32.gmra.mxu0 %v102
  %v310 = vpop.f32.mrf.mxu0
  %v311 = vadd.f32 0.0, %v310
  %312 = vmatmul.f32.gmra.mxu0 %v105
  %v313 = vpop.f32.mrf.mxu0
  %v314 = vadd.f32 0.0, %v313
  %315 = vmatmul.f32.gmra.mxu0 %v108
  %v316 = vpop.f32.mrf.mxu0
  %v317 = vadd.f32 0.0, %v316
  %318 = vmatmul.f32.gmra.mxu0 %v111
  %v319 = vpop.f32.mrf.mxu0
  %v320 = vadd.f32 0.0, %v319
  %321 = vmatmul.f32.gmra.mxu0 %v114
  %v322 = vpop.f32.mrf.mxu0
  %v323 = vadd.f32 0.0, %v322
  %324 = vmatmul.f32.gmra.mxu0 %v117
  %v325 = vpop.f32.mrf.mxu0
  %v326 = vadd.f32 0.0, %v325
  %327 = vmatmul.f32.gmra.mxu0 %v120
  %v328 = vpop.f32.mrf.mxu0
  %v329 = vadd.f32 0.0, %v328
  %330 = vmatmul.f32.gmra.mxu0 %v123
  %v331 = vpop.f32.mrf.mxu0
  %v332 = vadd.f32 0.0, %v331
  %333 = vmatmul.f32.gmra.mxu0 %v126
  %v334 = vpop.f32.mrf.mxu0
  %v335 = vadd.f32 0.0, %v334
  %336 = vmatmul.f32.gmra.mxu0 %v129
  %v337 = vpop.f32.mrf.mxu0
  %v338 = vadd.f32 0.0, %v337
  %339 = vmatmul.f32.gmra.mxu0 %v132
  %v340 = vpop.f32.mrf.mxu0
  %v341 = vadd.f32 0.0, %v340
  %342 = vmatmul.f32.gmra.mxu0 %v135
  %v343 = vpop.f32.mrf.mxu0
  %v344 = vadd.f32 0.0, %v343
  %345 = vmatmul.f32.gmra.mxu0 %v138
  %v346 = vpop.f32.mrf.mxu0
  %v347 = vadd.f32 0.0, %v346
  %348 = vmatmul.f32.gmra.mxu0 %v141
  %v349 = vpop.f32.mrf.mxu0
  %v350 = vadd.f32 0.0, %v349
  %351 = vmatmul.f32.gmra.mxu0 %v144
  %v352 = vpop.f32.mrf.mxu0
  %v353 = vadd.f32 0.0, %v352
  %354 = vmatmul.f32.gmra.mxu0 %v147
  %v355 = vpop.f32.mrf.mxu0
  %v356 = vadd.f32 0.0, %v355
  %357 = vmatmul.f32.gmra.mxu0 %v150
  %v358 = vpop.f32.mrf.mxu0
  %v359 = vadd.f32 0.0, %v358
  %360 = vmatmul.f32.gmra.mxu0 %v153
  %v361 = vpop.f32.mrf.mxu0
  %v362 = vadd.f32 0.0, %v361
  %363 = vmatmul.f32.gmra.mxu0 %v156
  %v364 = vpop.f32.mrf.mxu0
  %v365 = vadd.f32 0.0, %v364
  %366 = vmatmul.f32.gmra.mxu0 %v159
  %v367 = vpop.f32.mrf.mxu0
  %v368 = vadd.f32 0.0, %v367
  %369 = vmatmul.f32.gmra.mxu0 %v162
  %v370 = vpop.f32.mrf.mxu0
  %v371 = vadd.f32 0.0, %v370
  %372 = vmatmul.f32.gmra.mxu0 %v165
  %v373 = vpop.f32.mrf.mxu0
  %v374 = vadd.f32 0.0, %v373
  %375 = vmatmul.f32.gmra.mxu0 %v168
  %v376 = vpop.f32.mrf.mxu0
  %v377 = vadd.f32 0.0, %v376
  %378 = vmatmul.f32.gmra.mxu0 %v171
  %v379 = vpop.f32.mrf.mxu0
  %v380 = vadd.f32 0.0, %v379
  %381 = vmatmul.f32.gmra.mxu0 %v174
  %v382 = vpop.f32.mrf.mxu0
  %v383 = vadd.f32 0.0, %v382
  %384 = vmatmul.f32.gmra.mxu0 %v177
  %v385 = vpop.f32.mrf.mxu0
  %v386 = vadd.f32 0.0, %v385
  %387 = vmatmul.f32.gmra.mxu0 %v180
  %v388 = vpop.f32.mrf.mxu0
  %v389 = vadd.f32 0.0, %v388
  %390 = vmatmul.f32.gmra.mxu0 %v183
  %v391 = vpop.f32.mrf.mxu0
  %v392 = vadd.f32 0.0, %v391
  %393 = vmatmul.f32.gmra.mxu0 %v186
  %v394 = vpop.f32.mrf.mxu0
  %v395 = vadd.f32 0.0, %v394
  %396 = vmatmul.f32.gmra.mxu0 %v189
  %v397 = vpop.f32.mrf.mxu0
  %v398 = vadd.f32 0.0, %v397
  %399 = vmatmul.f32.gmra.mxu0 %v192
  %v400 = vpop.f32.mrf.mxu0
  %v401 = vadd.f32 0.0, %v400
  %402 = vmatmul.f32.gmra.mxu0 %v195
  %v403 = vpop.f32.mrf.mxu0
  %v404 = vadd.f32 0.0, %v403
  %405 = vmatmul.f32.gmra.mxu0 %v198
  %v406 = vpop.f32.mrf.mxu0
  %v407 = vadd.f32 0.0, %v406
  %408 = vmatmul.f32.gmra.mxu0 %v201
  %v409 = vpop.f32.mrf.mxu0
  %v410 = vadd.f32 0.0, %v409
  %411 = vmatmul.f32.gmra.mxu0 %v204
  %v412 = vpop.f32.mrf.mxu0
  %v413 = vadd.f32 0.0, %v412
  %414 = vmatmul.f32.gmra.mxu0 %v207
  %v415 = vpop.f32.mrf.mxu0
  %v416 = vadd.f32 0.0, %v415
  %417 = vmatmul.f32.gmra.mxu0 %v210
  %v418 = vpop.f32.mrf.mxu0
  %v419 = vadd.f32 0.0, %v418
  %420 = vmatmul.f32.gmra.mxu0 %v213
  %v421 = vpop.f32.mrf.mxu0
  %v422 = vadd.f32 0.0, %v421
  %423 = vmatmul.f32.gmra.mxu0 %v216
  %v424 = vpop.f32.mrf.mxu0
  %v425 = vadd.f32 0.0, %v424
  %426 = vmatmul.f32.gmra.mxu0 %v219
  %v427 = vpop.f32.mrf.mxu0
  %v428 = vadd.f32 0.0, %v427
  %429 = vmatmul.f32.gmra.mxu0 %v222
  %v430 = vpop.f32.mrf.mxu0
  %v431 = vadd.f32 0.0, %v430
  %432 = vmatmul.f32.gmra.mxu0 %v225
  %v433 = vpop.f32.mrf.mxu0
  %v434 = vadd.f32 0.0, %v433
  %435 = vmatmul.f32.gmra.mxu0 %v228
  %v436 = vpop.f32.mrf.mxu0
  %v437 = vadd.f32 0.0, %v436
  %438 = vmatmul.f32.gmra.mxu0 %v231
  %v439 = vpop.f32.mrf.mxu0
  %v440 = vadd.f32 0.0, %v439
  %441 = vmatmul.f32.gmra.mxu0 %v234
  %v442 = vpop.f32.mrf.mxu0
  %v443 = vadd.f32 0.0, %v442
  %444 = vmatmul.f32.gmra.mxu0 %v237
  %v445 = vpop.f32.mrf.mxu0
  %v446 = vadd.f32 0.0, %v445
  %447 = vmatmul.f32.gmra.mxu0 %v240
  %v448 = vpop.f32.mrf.mxu0
  %v449 = vadd.f32 0.0, %v448
  %450 = vmatmul.f32.gmra.mxu0 %v243
  %v451 = vpop.f32.mrf.mxu0
  %v452 = vadd.f32 0.0, %v451
  %453 = vmatmul.f32.gmra.mxu0 %v246
  %v454 = vpop.f32.mrf.mxu0
  %v455 = vadd.f32 0.0, %v454
  %456 = vmatmul.f32.gmra.mxu0 %v249
  %v457 = vpop.f32.mrf.mxu0
  %v458 = vadd.f32 0.0, %v457
  %459 = vmatmul.f32.gmra.mxu0 %v252
  %v460 = vpop.f32.mrf.mxu0
  %v461 = vadd.f32 0.0, %v460
  %462 = vmatmul.f32.gmra.mxu0 %v255
  %v463 = vpop.f32.mrf.mxu0
  %v464 = vadd.f32 0.0, %v463
  %465 = vmatmul.f32.gmra.mxu0 %v258
  %v466 = vpop.f32.mrf.mxu0
  %v467 = vadd.f32 0.0, %v466
  %468 = vmatmul.f32.gmra.mxu0 %v261
  %v469 = vpop.f32.mrf.mxu0
  %v470 = vadd.f32 0.0, %v469
  %471 = vmatmul.f32.gmra.mxu0 %v264
  %v472 = vpop.f32.mrf.mxu0
  %v473 = vadd.f32 0.0, %v472
  %474 = vmatmul.f32.gmra.mxu0 %v267
  %v475 = vpop.f32.mrf.mxu0
  %v476 = vadd.f32 0.0, %v475
  %477 = vmatmul.f32.gmra.mxu0 %v270
  %v478 = vpop.f32.mrf.mxu0
  %v479 = vadd.f32 0.0, %v478
  %480 = vmatmul.f32.gmra.mxu0 %v273
  %v481 = vpop.f32.mrf.mxu0
  %v482 = vadd.f32 0.0, %v481
  %483 = vdwg.mxu0
  %v484 = vld [vmem:[%s2] sm:$0x1]
  %v486 = vperm.slane %v484, 0
  %v488 = vmul.f32 %v293, %v486
  %v489 = vmul.f32 %v296, %v486
  %v490 = vmul.f32 %v299, %v486
  %v491 = vmul.f32 %v302, %v486
  %v492 = vmul.f32 %v305, %v486
  %v493 = vmul.f32 %v308, %v486
  %v494 = vmul.f32 %v311, %v486
  %v495 = vmul.f32 %v314, %v486
  %v496 = vmul.f32 %v317, %v486
  %v497 = vmul.f32 %v320, %v486
  %v498 = vmul.f32 %v323, %v486
  %v499 = vmul.f32 %v326, %v486
  %v500 = vmul.f32 %v329, %v486
  %v501 = vmul.f32 %v332, %v486
  %v502 = vmul.f32 %v335, %v486
  %v503 = vmul.f32 %v338, %v486
  %v504 = vmul.f32 %v341, %v486
  %v505 = vmul.f32 %v344, %v486
  %v506 = vmul.f32 %v347, %v486
  %v507 = vmul.f32 %v350, %v486
  %v508 = vmul.f32 %v353, %v486
  %v509 = vmul.f32 %v356, %v486
  %v510 = vmul.f32 %v359, %v486
  %v511 = vmul.f32 %v362, %v486
  %v512 = vmul.f32 %v365, %v486
  %v513 = vmul.f32 %v368, %v486
  %v514 = vmul.f32 %v371, %v486
  %v515 = vmul.f32 %v374, %v486
  %v516 = vmul.f32 %v377, %v486
  %v517 = vmul.f32 %v380, %v486
  %v518 = vmul.f32 %v383, %v486
  %v519 = vmul.f32 %v386, %v486
  %v520 = vmul.f32 %v389, %v486
  %v521 = vmul.f32 %v392, %v486
  %v522 = vmul.f32 %v395, %v486
  %v523 = vmul.f32 %v398, %v486
  %v524 = vmul.f32 %v401, %v486
  %v525 = vmul.f32 %v404, %v486
  %v526 = vmul.f32 %v407, %v486
  %v527 = vmul.f32 %v410, %v486
  %v528 = vmul.f32 %v413, %v486
  %v529 = vmul.f32 %v416, %v486
  %v530 = vmul.f32 %v419, %v486
  %v531 = vmul.f32 %v422, %v486
  %v532 = vmul.f32 %v425, %v486
  %v533 = vmul.f32 %v428, %v486
  %v534 = vmul.f32 %v431, %v486
  %v535 = vmul.f32 %v434, %v486
  %v536 = vmul.f32 %v437, %v486
  %v537 = vmul.f32 %v440, %v486
  %v538 = vmul.f32 %v443, %v486
  %v539 = vmul.f32 %v446, %v486
  %v540 = vmul.f32 %v449, %v486
  %v541 = vmul.f32 %v452, %v486
  %v542 = vmul.f32 %v455, %v486
  %v543 = vmul.f32 %v458, %v486
  %v544 = vmul.f32 %v461, %v486
  %v545 = vmul.f32 %v464, %v486
  %v546 = vmul.f32 %v467, %v486
  %v547 = vmul.f32 %v470, %v486
  %v548 = vmul.f32 %v473, %v486
  %v549 = vmul.f32 %v476, %v486
  %v550 = vmul.f32 %v479, %v486
  %v551 = vmul.f32 %v482, %v486
  %v552 = vld [vmem:[%s3] sm:$0x1]
  %v554 = vperm.slane %v552, 0
  %v556 = vadd.f32 %v488, %v554
  %v557 = vadd.f32 %v489, %v554
  %v558 = vadd.f32 %v490, %v554
  %v559 = vadd.f32 %v491, %v554
  %v560 = vadd.f32 %v492, %v554
  %v561 = vadd.f32 %v493, %v554
  %v562 = vadd.f32 %v494, %v554
  %v563 = vadd.f32 %v495, %v554
  %v564 = vadd.f32 %v496, %v554
  %v565 = vadd.f32 %v497, %v554
  %v566 = vadd.f32 %v498, %v554
  %v567 = vadd.f32 %v499, %v554
  %v568 = vadd.f32 %v500, %v554
  %v569 = vadd.f32 %v501, %v554
  %v570 = vadd.f32 %v502, %v554
  %v571 = vadd.f32 %v503, %v554
  %v572 = vadd.f32 %v504, %v554
  %v573 = vadd.f32 %v505, %v554
  %v574 = vadd.f32 %v506, %v554
  %v575 = vadd.f32 %v507, %v554
  %v576 = vadd.f32 %v508, %v554
  %v577 = vadd.f32 %v509, %v554
  %v578 = vadd.f32 %v510, %v554
  %v579 = vadd.f32 %v511, %v554
  %v580 = vadd.f32 %v512, %v554
  %v581 = vadd.f32 %v513, %v554
  %v582 = vadd.f32 %v514, %v554
  %v583 = vadd.f32 %v515, %v554
  %v584 = vadd.f32 %v516, %v554
  %v585 = vadd.f32 %v517, %v554
  %v586 = vadd.f32 %v518, %v554
  %v587 = vadd.f32 %v519, %v554
  %v588 = vadd.f32 %v520, %v554
  %v589 = vadd.f32 %v521, %v554
  %v590 = vadd.f32 %v522, %v554
  %v591 = vadd.f32 %v523, %v554
  %v592 = vadd.f32 %v524, %v554
  %v593 = vadd.f32 %v525, %v554
  %v594 = vadd.f32 %v526, %v554
  %v595 = vadd.f32 %v527, %v554
  %v596 = vadd.f32 %v528, %v554
  %v597 = vadd.f32 %v529, %v554
  %v598 = vadd.f32 %v530, %v554
  %v599 = vadd.f32 %v531, %v554
  %v600 = vadd.f32 %v532, %v554
  %v601 = vadd.f32 %v533, %v554
  %v602 = vadd.f32 %v534, %v554
  %v603 = vadd.f32 %v535, %v554
  %v604 = vadd.f32 %v536, %v554
  %v605 = vadd.f32 %v537, %v554
  %v606 = vadd.f32 %v538, %v554
  %v607 = vadd.f32 %v539, %v554
  %v608 = vadd.f32 %v540, %v554
  %v609 = vadd.f32 %v541, %v554
  %v610 = vadd.f32 %v542, %v554
  %v611 = vadd.f32 %v543, %v554
  %v612 = vadd.f32 %v544, %v554
  %v613 = vadd.f32 %v545, %v554
  %v614 = vadd.f32 %v546, %v554
  %v615 = vadd.f32 %v547, %v554
  %v616 = vadd.f32 %v548, %v554
  %v617 = vadd.f32 %v549, %v554
  %v618 = vadd.f32 %v550, %v554
  %v619 = vadd.f32 %v551, %v554
  %v620 = vmax.f32 %v556, 0.0
  %v621 = vmax.f32 %v557, 0.0
  %v622 = vmax.f32 %v558, 0.0
  %v623 = vmax.f32 %v559, 0.0
  %v624 = vmax.f32 %v560, 0.0
  %v625 = vmax.f32 %v561, 0.0
  %v626 = vmax.f32 %v562, 0.0
  %v627 = vmax.f32 %v563, 0.0
  %v628 = vmax.f32 %v564, 0.0
  %v629 = vmax.f32 %v565, 0.0
  %v630 = vmax.f32 %v566, 0.0
  %v631 = vmax.f32 %v567, 0.0
  %v632 = vmax.f32 %v568, 0.0
  %v633 = vmax.f32 %v569, 0.0
  %v634 = vmax.f32 %v570, 0.0
  %v635 = vmax.f32 %v571, 0.0
  %v636 = vmax.f32 %v572, 0.0
  %v637 = vmax.f32 %v573, 0.0
  %v638 = vmax.f32 %v574, 0.0
  %v639 = vmax.f32 %v575, 0.0
  %v640 = vmax.f32 %v576, 0.0
  %v641 = vmax.f32 %v577, 0.0
  %v642 = vmax.f32 %v578, 0.0
  %v643 = vmax.f32 %v579, 0.0
  %v644 = vmax.f32 %v580, 0.0
  %v645 = vmax.f32 %v581, 0.0
  %v646 = vmax.f32 %v582, 0.0
  %v647 = vmax.f32 %v583, 0.0
  %v648 = vmax.f32 %v584, 0.0
  %v649 = vmax.f32 %v585, 0.0
  %v650 = vmax.f32 %v586, 0.0
  %v651 = vmax.f32 %v587, 0.0
  %v652 = vmax.f32 %v588, 0.0
  %v653 = vmax.f32 %v589, 0.0
  %v654 = vmax.f32 %v590, 0.0
  %v655 = vmax.f32 %v591, 0.0
  %v656 = vmax.f32 %v592, 0.0
  %v657 = vmax.f32 %v593, 0.0
  %v658 = vmax.f32 %v594, 0.0
  %v659 = vmax.f32 %v595, 0.0
  %v660 = vmax.f32 %v596, 0.0
  %v661 = vmax.f32 %v597, 0.0
  %v662 = vmax.f32 %v598, 0.0
  %v663 = vmax.f32 %v599, 0.0
  %v664 = vmax.f32 %v600, 0.0
  %v665 = vmax.f32 %v601, 0.0
  %v666 = vmax.f32 %v602, 0.0
  %v667 = vmax.f32 %v603, 0.0
  %v668 = vmax.f32 %v604, 0.0
  %v669 = vmax.f32 %v605, 0.0
  %v670 = vmax.f32 %v606, 0.0
  %v671 = vmax.f32 %v607, 0.0
  %v672 = vmax.f32 %v608, 0.0
  %v673 = vmax.f32 %v609, 0.0
  %v674 = vmax.f32 %v610, 0.0
  %v675 = vmax.f32 %v611, 0.0
  %v676 = vmax.f32 %v612, 0.0
  %v677 = vmax.f32 %v613, 0.0
  %v678 = vmax.f32 %v614, 0.0
  %v679 = vmax.f32 %v615, 0.0
  %v680 = vmax.f32 %v616, 0.0
  %v681 = vmax.f32 %v617, 0.0
  %v682 = vmax.f32 %v618, 0.0
  %v683 = vmax.f32 %v619, 0.0
  %vm684 = vcmask 31744
  %685 = vst.msk [vmem:[%s4] sm:$0xff] %vm684, %v620
  %686 = vst.msk [vmem:[%s4 + $0x8] sm:$0xff] %vm684, %v621
  %687 = vst.msk [vmem:[%s4 + $0x10] sm:$0xff] %vm684, %v622
  %688 = vst.msk [vmem:[%s4 + $0x18] sm:$0xff] %vm684, %v623
  %689 = vst.msk [vmem:[%s4 + $0x20] sm:$0xff] %vm684, %v624
  %690 = vst.msk [vmem:[%s4 + $0x28] sm:$0xff] %vm684, %v625
  %691 = vst.msk [vmem:[%s4 + $0x30] sm:$0xff] %vm684, %v626
  %692 = vst.msk [vmem:[%s4 + $0x38] sm:$0xff] %vm684, %v627
  %693 = vst.msk [vmem:[%s4 + $0x40] sm:$0xff] %vm684, %v628
  %694 = vst.msk [vmem:[%s4 + $0x48] sm:$0xff] %vm684, %v629
  %695 = vst.msk [vmem:[%s4 + $0x50] sm:$0xff] %vm684, %v630
  %696 = vst.msk [vmem:[%s4 + $0x58] sm:$0xff] %vm684, %v631
  %697 = vst.msk [vmem:[%s4 + $0x60] sm:$0xff] %vm684, %v632
  %698 = vst.msk [vmem:[%s4 + $0x68] sm:$0xff] %vm684, %v633
  %699 = vst.msk [vmem:[%s4 + $0x70] sm:$0xff] %vm684, %v634
  %700 = vst.msk [vmem:[%s4 + $0x78] sm:$0xff] %vm684, %v635
  %701 = vst.msk [vmem:[%s4 + $0x80] sm:$0xff] %vm684, %v636
  %702 = vst.msk [vmem:[%s4 + $0x88] sm:$0xff] %vm684, %v637
  %703 = vst.msk [vmem:[%s4 + $0x90] sm:$0xff] %vm684, %v638
  %704 = vst.msk [vmem:[%s4 + $0x98] sm:$0xff] %vm684, %v639
  %705 = vst.msk [vmem:[%s4 + $0xa0] sm:$0xff] %vm684, %v640
  %706 = vst.msk [vmem:[%s4 + $0xa8] sm:$0xff] %vm684, %v641
  %707 = vst.msk [vmem:[%s4 + $0xb0] sm:$0xff] %vm684, %v642
  %708 = vst.msk [vmem:[%s4 + $0xb8] sm:$0xff] %vm684, %v643
  %709 = vst.msk [vmem:[%s4 + $0xc0] sm:$0xff] %vm684, %v644
  %710 = vst.msk [vmem:[%s4 + $0xc8] sm:$0xff] %vm684, %v645
  %711 = vst.msk [vmem:[%s4 + $0xd0] sm:$0xff] %vm684, %v646
  %712 = vst.msk [vmem:[%s4 + $0xd8] sm:$0xff] %vm684, %v647
  %713 = vst.msk [vmem:[%s4 + $0xe0] sm:$0xff] %vm684, %v648
  %714 = vst.msk [vmem:[%s4 + $0xe8] sm:$0xff] %vm684, %v649
  %715 = vst.msk [vmem:[%s4 + $0xf0] sm:$0xff] %vm684, %v650
  %716 = vst.msk [vmem:[%s4 + $0xf8] sm:$0xff] %vm684, %v651
  %717 = vst.msk [vmem:[%s4 + $0x100] sm:$0xff] %vm684, %v652
  %718 = vst.msk [vmem:[%s4 + $0x108] sm:$0xff] %vm684, %v653
  %719 = vst.msk [vmem:[%s4 + $0x110] sm:$0xff] %vm684, %v654
  %720 = vst.msk [vmem:[%s4 + $0x118] sm:$0xff] %vm684, %v655
  %721 = vst.msk [vmem:[%s4 + $0x120] sm:$0xff] %vm684, %v656
  %722 = vst.msk [vmem:[%s4 + $0x128] sm:$0xff] %vm684, %v657
  %723 = vst.msk [vmem:[%s4 + $0x130] sm:$0xff] %vm684, %v658
  %724 = vst.msk [vmem:[%s4 + $0x138] sm:$0xff] %vm684, %v659
  %725 = vst.msk [vmem:[%s4 + $0x140] sm:$0xff] %vm684, %v660
  %726 = vst.msk [vmem:[%s4 + $0x148] sm:$0xff] %vm684, %v661
  %727 = vst.msk [vmem:[%s4 + $0x150] sm:$0xff] %vm684, %v662
  %728 = vst.msk [vmem:[%s4 + $0x158] sm:$0xff] %vm684, %v663
  %729 = vst.msk [vmem:[%s4 + $0x160] sm:$0xff] %vm684, %v664
  %730 = vst.msk [vmem:[%s4 + $0x168] sm:$0xff] %vm684, %v665
  %731 = vst.msk [vmem:[%s4 + $0x170] sm:$0xff] %vm684, %v666
  %732 = vst.msk [vmem:[%s4 + $0x178] sm:$0xff] %vm684, %v667
  %733 = vst.msk [vmem:[%s4 + $0x180] sm:$0xff] %vm684, %v668
  %734 = vst.msk [vmem:[%s4 + $0x188] sm:$0xff] %vm684, %v669
  %735 = vst.msk [vmem:[%s4 + $0x190] sm:$0xff] %vm684, %v670
  %736 = vst.msk [vmem:[%s4 + $0x198] sm:$0xff] %vm684, %v671
  %737 = vst.msk [vmem:[%s4 + $0x1a0] sm:$0xff] %vm684, %v672
  %738 = vst.msk [vmem:[%s4 + $0x1a8] sm:$0xff] %vm684, %v673
  %739 = vst.msk [vmem:[%s4 + $0x1b0] sm:$0xff] %vm684, %v674
  %740 = vst.msk [vmem:[%s4 + $0x1b8] sm:$0xff] %vm684, %v675
  %741 = vst.msk [vmem:[%s4 + $0x1c0] sm:$0xff] %vm684, %v676
  %742 = vst.msk [vmem:[%s4 + $0x1c8] sm:$0xff] %vm684, %v677
  %743 = vst.msk [vmem:[%s4 + $0x1d0] sm:$0xff] %vm684, %v678
  %744 = vst.msk [vmem:[%s4 + $0x1d8] sm:$0xff] %vm684, %v679
  %745 = vst.msk [vmem:[%s4 + $0x1e0] sm:$0xff] %vm684, %v680
  %746 = vst.msk [vmem:[%s4 + $0x1e8] sm:$0xff] %vm684, %v681
  %747 = vst.msk [vmem:[%s4 + $0x1f0] sm:$0xff] %vm684, %v682
  %748 = vst.msk [vmem:[%s4 + $0x1f8] sm:$0xff] %vm684, %v683
  // Predicated region
  $region18: #{tpu_custom_call.1} parent=0 // pred_check
    _
  $region19: #{tpu_custom_call.1} parent=0 // pred_check_branch
    %750 = sbr.rel (0) target = $region21
  $region20: #{tpu_custom_call.1} parent=0 // pred_region
    _
  $region21: #{tpu_custom_call.1} parent=0 // pred_fallthru
    _
  // Predicated region
  $region22: #{tpu_custom_call.1} parent=0 // pred_check
    _
  $region23: #{tpu_custom_call.1} parent=0 // pred_check_branch
    %752 = sbr.rel (0) target = $region25
  $region24: #{tpu_custom_call.1} parent=0 // pred_region
    _
  $region25: #{tpu_custom_call.1} parent=0 // pred_fallthru
    _

</llo_original>
